<compile_context>
chip_gen: v7x
topology: tpu7x:2x2x1
jax: 0.10.0
libtpu: 0.0.40
codegen_flags: <defaults>
</compile_context>

<pallas_src>
import math

import jax
import jax.numpy as jnp
from jax.experimental import pallas as pl
from jax.experimental.pallas import tpu as pltpu


# ----------------------------------------------------------------------------
# Deterministic synthetic parameters (the source references an external D12_Q
# table of 12x12 matrices — element matrices of the dihedral group D12).
# ----------------------------------------------------------------------------
def _make_d12_q():
    n = 12
    eye = jnp.eye(n, dtype=jnp.float32)
    rot = jnp.roll(eye, shift=1, axis=1)   # "rotation by 1": cyclic shift
    refl = eye[::-1, :]                    # "reflection": reversal
    return {"rot1": rot, "refl": refl}


D12_Q = _make_d12_q()
MULT_MODEL = {"rot1": 32, "refl": 16}      # d_model per key (must be even)


# ----------------------------------------------------------------------------
# Host-side (pure JAX) construction of the grid-invariant additive table.
#   add[l, g, c] = (sum_j Q[g, j]) * pe[l, c]
# which equals (Q @ ones(12,1)) @ pe == Q @ (ones @ pe) from the reference.
# ----------------------------------------------------------------------------
def _make_add_table(q, L, d):
    pos = jnp.arange(L, dtype=jnp.float32)[:, None]                     # (L, 1)
    div = jnp.exp(jnp.arange(0, d, 2, dtype=jnp.float32)
                  * (-(math.log(10000.0) / d)))                         # (d/2,)
    ang = pos * div                                                     # (L, d/2)
    pe = jnp.stack([jnp.sin(ang), jnp.cos(ang)], axis=-1).reshape(L, d) # even=sin, odd=cos
    q_row_sum = jnp.sum(q, axis=1)                                      # (12,) == Q @ ones
    add = q_row_sum[None, :, None] * pe[:, None, :]                     # (L, 12, d)
    return add.reshape(1, L, 12 * d).astype(jnp.float32)                # lane-dense


# ----------------------------------------------------------------------------
# Pallas kernel: plain memory-bound residual add of one batch slab per step.
# ----------------------------------------------------------------------------
def _residual_add_kernel(x_ref, add_ref, o_ref):
    # x_ref / o_ref / add_ref: (1, L, 12*D)
    o_ref[...] = x_ref[...] + add_ref[...]


def positional_encoding_pallas(x_dict, q_dict=D12_Q, mult_model=MULT_MODEL):
    out = {}
    for k, v in x_dict.items():
        d = mult_model[k]
        B, L, G, D = v.shape
        assert G == 12 and D == d and d % 2 == 0
        GD = G * D

        add = _make_add_table(q_dict[k], L, d)          # (1, L, 12*D), static
        x_flat = v.reshape(B, L, GD)                    # lane-dense layout

        y_flat = pl.pallas_call(
            _residual_add_kernel,
            out_shape=jax.ShapeDtypeStruct((B, L, GD), v.dtype),
            grid=(B,),
            in_specs=[
                pl.BlockSpec((1, L, GD), lambda b: (b, 0, 0)),
                # Same block every step -> table stays resident in VMEM.
                pl.BlockSpec((1, L, GD), lambda b: (0, 0, 0)),
            ],
            out_specs=pl.BlockSpec((1, L, GD), lambda b: (b, 0, 0)),
            compiler_params=pltpu.CompilerParams(
                dimension_semantics=("parallel",)),
        )(x_flat, add)

        out[k] = y_flat.reshape(B, L, G, D)
    return out


# ----------------------------------------------------------------------------
# Pure-JAX reference (mirrors the PyTorch forward exactly).
# ----------------------------------------------------------------------------
def positional_encoding_ref(x_dict, q_dict=D12_Q, mult_model=MULT_MODEL):
    ones = jnp.ones((12, 1), dtype=jnp.float32)
    out = {}
    for k, v in x_dict.items():
        L = v.shape[1]
        d = mult_model[k]
        pos = jnp.arange(L, dtype=jnp.float32)[:, None]
        div = jnp.exp(jnp.arange(0, d, 2, dtype=jnp.float32)
                      * (-(math.log(10000.0) / d)))
        pe = jnp.zeros((L, 1, d), dtype=jnp.float32)
        pe = pe.at[:, :, 0::2].set(jnp.sin(pos * div)[:, None, :])
        pe = pe.at[:, :, 1::2].set(jnp.cos(pos * div)[:, None, :])
        pe = pe[None]                                     # (1, L, 1, d)
        out[k] = v + jnp.matmul(q_dict[k], jnp.matmul(ones, pe))
    return out


if __name__ == "__main__":
    key = jax.random.PRNGKey(0)
    k1, k2 = jax.random.split(key)
    x = {
        "rot1": jax.random.normal(k1, (2, 8, 12, MULT_MODEL["rot1"]),
                                  dtype=jnp.float32),
        "refl": jax.random.normal(k2, (2, 6, 12, MULT_MODEL["refl"]),
                                  dtype=jnp.float32),
    }

    out = positional_encoding_pallas(x)
    out = {k: jax.block_until_ready(v) for k, v in out.items()}

    ref = positional_encoding_ref(x)
    for k in x:
        assert out[k].shape == x[k].shape and out[k].dtype == x[k].dtype
        assert jnp.allclose(out[k], ref[k], atol=1e-5, rtol=1e-5), k

    print("KERNEL_OK")
</pallas_src>

<mosaic_0001>
module attributes {stable_mosaic.version = 11 : i64} {
  func.func @_residual_add_kernel(%arg0: i32, %arg1: memref<1x8x384xf32, #tpu.memory_space<vmem>>, %arg2: memref<1x8x384xf32, #tpu.memory_space<vmem>>, %arg3: memref<1x8x384xf32, #tpu.memory_space<vmem>>) attributes {dimension_semantics = [#tpu.dimension_semantics<parallel>], iteration_bounds = array<i64: 2>, scalar_prefetch = 0 : i64, scratch_operands = 0 : i64, tpu.core_type = #tpu.core_type<tc>, window_params = [{transform_indices = @transform_0, window_bounds = array<i64: 1, 8, 384>}, {pipeline_mode = #tpu.pipeline_mode<synchronous>, transform_indices = @transform_1, window_bounds = array<i64: 1, 8, 384>}, {transform_indices = @transform_2, window_bounds = array<i64: 1, 8, 384>}]} {
    %c0 = arith.constant 0 : index
    %c0_0 = arith.constant 0 : index
    %c0_1 = arith.constant 0 : index
    %0 = vector.load %arg1[%c0, %c0_0, %c0_1] : memref<1x8x384xf32, #tpu.memory_space<vmem>>, vector<1x8x384xf32>
    %c0_2 = arith.constant 0 : index
    %c0_3 = arith.constant 0 : index
    %c0_4 = arith.constant 0 : index
    %1 = vector.load %arg2[%c0_2, %c0_3, %c0_4] : memref<1x8x384xf32, #tpu.memory_space<vmem>>, vector<1x8x384xf32>
    %2 = arith.addf %0, %1 : vector<1x8x384xf32>
    %c0_5 = arith.constant 0 : index
    %c0_6 = arith.constant 0 : index
    %c0_7 = arith.constant 0 : index
    %3 = vector.load %arg3[%c0_5, %c0_6, %c0_7] : memref<1x8x384xf32, #tpu.memory_space<vmem>>, vector<1x8x384xf32>
    tpu.vector_store %arg3[%c0_5, %c0_6, %c0_7], %2 {strides = array<i32>} : memref<1x8x384xf32, #tpu.memory_space<vmem>>, vector<1x8x384xf32>,
    return
  }
  func.func @transform_0(%arg0: i32) -> (i32, i32, i32) {
    %c0_i32 = arith.constant 0 : i32
    %c0_i32_0 = arith.constant 0 : i32
    %c0_i32_1 = arith.constant 0 : i32
    return %arg0, %c0_i32, %c0_i32_0 : i32, i32, i32
  }
  func.func @transform_1(%arg0: i32) -> (i32, i32, i32) {
    %c0_i32 = arith.constant 0 : i32
    %c0_i32_0 = arith.constant 0 : i32
    %c0_i32_1 = arith.constant 0 : i32
    %c0_i32_2 = arith.constant 0 : i32
    return %c0_i32, %c0_i32_0, %c0_i32_1 : i32, i32, i32
  }
  func.func @transform_2(%arg0: i32) -> (i32, i32, i32) {
    %c0_i32 = arith.constant 0 : i32
    %c0_i32_0 = arith.constant 0 : i32
    %c0_i32_1 = arith.constant 0 : i32
    return %arg0, %c0_i32, %c0_i32_0 : i32, i32, i32
  }
}

</mosaic_0001>

<llo_original>
// kernel: tpu_custom_call.1
$region0: #{tpu_custom_call.1}
  #allocation0 [shape = 'u32[]', space=smem, size = 0x4, offset = 0x4, fixed_abs, tag = 'smem constant byte address 0x4 - core index']
  #allocation1 [shape = 'u32[144,128]{1,0:T(1,128)}', space=vmem, size = 0x12000, scoped, tag = 'internal scratch']
  %s0 = inlined_call_operand.hbm [shape: f32[2,8,384], index: 0, kind: input, shape index: {}]
  %s1 = inlined_call_operand.hbm [shape: f32[1,8,384], index: 1, kind: input, shape index: {}]
  %s2 = inlined_call_operand.hbm [shape: f32[2,8,384], index: 2, kind: output, shape index: {}]
  %s3 = sld [smem:[#allocation0]]
  $region49: #{tpu_custom_call.1} parent=0
    _
  %s5 = ssub.s32 1, %s3
  %s6 = scalar_select 0, %s5, %s3
  $region1: #{tpu_custom_call.1} parent=0
    #allocation2 [shape = 'u8[24576]{0}', space=vmem, size = 0x6000, scoped, tag = 'input window, operand 0']
    #allocation3 [shape = 's32[2]{0}', space=sflag, size = 0x8, scoped, tag = 'scoped memory for tpu_custom_call.1']
    #allocation4 [shape = 's32[2]{0}', space=sflag, size = 0x8, scoped, tag = 'scoped memory for tpu_custom_call.1']
    #allocation5 [shape = 'u8[12288]{0}', space=vmem, size = 0x3000, scoped, tag = 'input window, operand 1, single buffered']
    #allocation6 [shape = 's32[1]{0}', space=sflag, size = 0x4, scoped, tag = 'scoped memory for tpu_custom_call.1']
    #allocation7 [shape = 'u8[24576]{0}', space=vmem, size = 0x6000, scoped, tag = 'output window, operand 0']
    %7 = vsyncpa [#allocation3], 0
    %s8 = scalar_lea.sflag [#allocation3], 1
    %9 = vsyncpa %s8, 0
    %10 = vsyncpa [#allocation6], 0
    %11 = vsyncpa [#allocation4], 0
    %s12 = scalar_lea.sflag [#allocation4], 1
    %13 = vsyncpa %s12, 0
    loop: start=0, step=1, limit=4
    $region2: #{tpu_custom_call.1} parent=1 // loop_pre_header
      _
    $region3: #{tpu_custom_call.1} parent=1 // loop_header
      %s15 = sphi 0, %s19
      %p16 = scmp.ge.s32.totalorder %s15, 4
      %s25 = sphi 0, %s27
      %s28 = sphi 0, %s25
      %s29 = sphi 0, %s28
      %s45 = sphi 0, %s29
      %s49 = sphi 0, %s49
      %s51 = sphi 0, %s49
      %s52 = sphi 0, %s51
      %s66 = sphi 0, %s52
      %s72 = sphi 0, %s74
      %s75 = sphi 0, %s72
      %s76 = sphi 0, %s75
      %s92 = sphi 0, %s76
    $region4: #{tpu_custom_call.1} parent=1 // loop_header_branch
      %18 = sbr.rel (%p16) target = $region8
    $region5: #{tpu_custom_call.1} parent=1 // loop_body
      %s20 = ssub.s32 %s15, 1
      %s21 = ssub.s32 %s15, 2
      %s22 = sadd.s32 %s15, 1
      %s23 = ssub.s32 %s15, %s22
      %p24 = scmp.eq.s32.totalorder %s23, 0
      %s26 = sadd.s32 %s25, 1
      %s27 = scalar_select %p24, %s25, %s26
      %p30 = pneg %p24
      %p31 = scmp.eq.s32.totalorder %s15, 1
      %p32 = por %p30, %p31
      %p33 = scmp.ne.s32.totalorder %s25, %s28
      %p34 = scmp.eq.s32.totalorder %s15, 0
      %p35 = por %p33, %p34
      %p36 = scmp.ne.s32.totalorder %s25, %s28
      %p37 = scmp.eq.s32.totalorder %s20, 1
      %p38 = por %p36, %p37
      %p39 = scmp.ne.s32.totalorder %s28, %s29
      %p40 = scmp.eq.s32.totalorder %s20, 0
      %p41 = por %p39, %p40
      %p42 = scmp.ne.s32.totalorder %s28, %s29
      %p43 = scmp.eq.s32.totalorder %s21, 1
      %p44 = por %p42, %p43
      %p46 = scmp.ne.s32.totalorder %s29, %s45
      %p47 = scmp.eq.s32.totalorder %s21, 0
      %p48 = por %p46, %p47
      %s50 = sadd.s32 %s49, 1
      %p53 = scmp.eq.s32.totalorder %s15, 1
      %p54 = scmp.ne.s32.totalorder %s49, %s51
      %p55 = scmp.eq.s32.totalorder %s15, 0
      %p56 = por %p54, %p55
      %p57 = scmp.ne.s32.totalorder %s49, %s51
      %p58 = scmp.eq.s32.totalorder %s20, 1
      %p59 = por %p57, %p58
      %p60 = scmp.ne.s32.totalorder %s51, %s52
      %p61 = scmp.eq.s32.totalorder %s20, 0
      %p62 = por %p60, %p61
      %p63 = scmp.ne.s32.totalorder %s51, %s52
      %p64 = scmp.eq.s32.totalorder %s21, 1
      %p65 = por %p63, %p64
      %p67 = scmp.ne.s32.totalorder %s52, %s66
      %p68 = scmp.eq.s32.totalorder %s21, 0
      %p69 = por %p67, %p68
      %s70 = ssub.s32 %s15, %s22
      %p71 = scmp.eq.s32.totalorder %s70, 0
      %s73 = sadd.s32 %s72, 1
      %s74 = scalar_select %p71, %s72, %s73
      %p77 = pneg %p71
      %p78 = scmp.eq.s32.totalorder %s15, 1
      %p79 = por %p77, %p78
      %p80 = scmp.ne.s32.totalorder %s72, %s75
      %p81 = scmp.eq.s32.totalorder %s15, 0
      %p82 = por %p80, %p81
      %p83 = scmp.ne.s32.totalorder %s72, %s75
      %p84 = scmp.eq.s32.totalorder %s20, 1
      %p85 = por %p83, %p84
      %p86 = scmp.ne.s32.totalorder %s75, %s76
      %p87 = scmp.eq.s32.totalorder %s20, 0
      %p88 = por %p86, %p87
      %p89 = scmp.ne.s32.totalorder %s75, %s76
      %p90 = scmp.eq.s32.totalorder %s21, 1
      %p91 = por %p89, %p90
      %p93 = scmp.ne.s32.totalorder %s76, %s92
      %p94 = scmp.eq.s32.totalorder %s21, 0
      %p95 = por %p93, %p94
      %p96 = scmp.le.s32.totalorder 1, %s15
      %p97 = scmp.lt.s32.totalorder %s15, 3
      %p98 = pnand %p96, %p97
      %p99 = pneg %p98
      // Predicated region
      $region9: #{tpu_custom_call.1} parent=5 // pred_check
        _
      $region10: #{tpu_custom_call.1} parent=5 // pred_check_branch
        %101 = sbr.rel (%p98) target = $region12
      $region11: #{tpu_custom_call.1} parent=5 // pred_region
        %s102 = ssub.s32 %s15, 1
        // Predicated region
        $region13: #{tpu_custom_call.1} parent=11 // pred_check
          %p103 = pneg %p62
        $region14: #{tpu_custom_call.1} parent=11 // pred_check_branch
          %105 = sbr.rel (%p103) target = $region16
        $region15: #{tpu_custom_call.1} parent=11 // pred_region
          %s107 = ssub.s32 384, 384
          %108 = vsyncadd [#allocation6], %s107
          %s110 = sshll.u32 [#allocation5], 4
          %s111 = int_to_ptr.vmem [resolvable:$true] %s110
          %113 = dma.hbm_to_vmem [thread:$0]  %s1, 384, %s111, [#allocation6]
        $region16: #{tpu_custom_call.1} parent=11 // pred_fallthru
          _
      $region12: #{tpu_custom_call.1} parent=5 // pred_fallthru
        _
      %p114 = scmp.lt.s32.totalorder %s15, 2
      // Predicated region
      $region17: #{tpu_custom_call.1} parent=5 // pred_check
        %p115 = pneg %p114
      $region18: #{tpu_custom_call.1} parent=5 // pred_check_branch
        %117 = sbr.rel (%p115) target = $region20
      $region19: #{tpu_custom_call.1} parent=5 // pred_region
        // Predicated region
        $region21: #{tpu_custom_call.1} parent=19 // pred_check
          %p118 = pneg %p35
        $region22: #{tpu_custom_call.1} parent=19 // pred_check_branch
          %120 = sbr.rel (%p118) target = $region24
        $region23: #{tpu_custom_call.1} parent=19 // pred_region
          %s121 = sand.u32 %s25, 1
          %s122 = scalar_lea.sflag [#allocation3], %s121
          %s123 = sand.u32 %s25, 1
          %s124 = smul.addr %s123, 24
          %s125 = scalar_lea.vmem [#allocation2], %s124
          %s127 = ssub.s32 384, 384
          %128 = vsyncadd %s122, %s127
          %s129 = smul.addr %s15, 3
          %s130 = smul.addr %s129, 128
          %s131 = scalar_lea.hbm %s0, %s130
          %s133 = sshll.u32 %s125, 4
          %s134 = int_to_ptr.vmem [resolvable:$true] %s133
          %136 = dma.hbm_to_vmem [thread:$0]  %s131, 384, %s134, %s122
        $region24: #{tpu_custom_call.1} parent=19 // pred_fallthru
          _
      $region20: #{tpu_custom_call.1} parent=5 // pred_fallthru
        _
      %p137 = scmp.le.s32.totalorder 1, %s15
      %p138 = scmp.lt.s32.totalorder %s15, 3
      %p139 = pnand %p137, %p138
      %p140 = pneg %p139
      // Predicated region
      $region25: #{tpu_custom_call.1} parent=5 // pred_check
        _
      $region26: #{tpu_custom_call.1} parent=5 // pred_check_branch
        %142 = sbr.rel (%p139) target = $region28
      $region27: #{tpu_custom_call.1} parent=5 // pred_region
        %s143 = ssub.s32 %s15, 1
        %s144 = sand.u32 %s28, 1
        %s145 = scalar_lea.sflag [#allocation3], %s144
        %s146 = sand.u32 %s28, 1
        %s147 = smul.addr %s146, 24
        %s148 = scalar_lea.vmem [#allocation2], %s147
        // Predicated region
        $region29: #{tpu_custom_call.1} parent=27 // pred_check
          %p149 = pneg %p41
        $region30: #{tpu_custom_call.1} parent=27 // pred_check_branch
          %151 = sbr.rel (%p149) target = $region32
        $region31: #{tpu_custom_call.1} parent=27 // pred_region
          %152 = dma.done %s145, 384
        $region32: #{tpu_custom_call.1} parent=27 // pred_fallthru
          _
        // Predicated region
        $region33: #{tpu_custom_call.1} parent=27 // pred_check
          %p153 = pneg %p62
        $region34: #{tpu_custom_call.1} parent=27 // pred_check_branch
          %155 = sbr.rel (%p153) target = $region36
        $region35: #{tpu_custom_call.1} parent=27 // pred_region
          %156 = dma.done [#allocation6], 384
        $region36: #{tpu_custom_call.1} parent=27 // pred_fallthru
          _
        %s157 = sand.u32 %s28, 1
        %s158 = scalar_lea.sflag [#allocation3], %s157
        %s159 = sand.u32 %s28, 1
        %s160 = smul.addr %s159, 24
        %s161 = scalar_lea.vmem [#allocation2], %s160
        %p162 = pneg %p41
        %p163 = pneg %p38
        %p164 = pneg %p62
        %p165 = pneg %p59
        %p166 = pneg %p88
        %p167 = pneg %p85
        %s168 = sand.u32 %s75, 1
        %s169 = scalar_lea.sflag [#allocation4], %s168
        %s170 = sand.u32 %s75, 1
        %s171 = smul.addr %s170, 24
        %s172 = scalar_lea.vmem [#allocation7], %s171
        %v173 = vld [vmem:[%s148] sm:$0xff]
        %v174 = vld [vmem:[%s148 + $0x8] sm:$0xff]
        %v175 = vld [vmem:[%s148 + $0x10] sm:$0xff]
        %v176 = vld [vmem:[#allocation5] sm:$0xff]
        %v177 = vld [vmem:[#allocation5 + $0x8] sm:$0xff]
        %v178 = vld [vmem:[#allocation5 + $0x10] sm:$0xff]
        %v179 = vadd.f32 %v173, %v176
        %v180 = vadd.f32 %v174, %v177
        %v181 = vadd.f32 %v175, %v178
        %182 = vst [vmem:[%s172] sm:$0xff] %v179
        %183 = vst [vmem:[%s172 + $0x8] sm:$0xff] %v180
        %184 = vst [vmem:[%s172 + $0x10] sm:$0xff] %v181
        %s185 = sand.u32 %s75, 1
        %s186 = scalar_lea.sflag [#allocation4], %s185
        %s187 = sand.u32 %s75, 1
        %s188 = smul.addr %s187, 24
        %s189 = scalar_lea.vmem [#allocation7], %s188
        // Predicated region
        $region37: #{tpu_custom_call.1} parent=27 // pred_check
          %p190 = pneg %p85
        $region38: #{tpu_custom_call.1} parent=27 // pred_check_branch
          %192 = sbr.rel (%p190) target = $region40
        $region39: #{tpu_custom_call.1} parent=27 // pred_region
          %s194 = ssub.s32 384, 384
          %195 = vsyncadd %s186, %s194
          %s196 = smul.addr %s20, 3
          %s197 = smul.addr %s196, 128
          %s198 = scalar_lea.hbm %s2, %s197
          %s200 = sshll.u32 %s189, 4
          %s201 = int_to_ptr.vmem [resolvable:$true] %s200
          %203 = dma.vmem_to_hbm [thread:$0]  %s201, 384, %s198, %s186
        $region40: #{tpu_custom_call.1} parent=27 // pred_fallthru
          _
      $region28: #{tpu_custom_call.1} parent=5 // pred_fallthru
        _
      %p204 = scmp.le.s32.totalorder 2, %s15
      // Predicated region
      $region41: #{tpu_custom_call.1} parent=5 // pred_check
        %p205 = pneg %p204
      $region42: #{tpu_custom_call.1} parent=5 // pred_check_branch
        %207 = sbr.rel (%p205) target = $region44
      $region43: #{tpu_custom_call.1} parent=5 // pred_region
        %s208 = ssub.s32 %s15, 2
        // Predicated region
        $region45: #{tpu_custom_call.1} parent=43 // pred_check
          %p209 = pneg %p91
        $region46: #{tpu_custom_call.1} parent=43 // pred_check_branch
          %211 = sbr.rel (%p209) target = $region48
        $region47: #{tpu_custom_call.1} parent=43 // pred_region
          %s212 = sand.u32 %s76, 1
          %s213 = scalar_lea.sflag [#allocation4], %s212
          %s214 = sand.u32 %s76, 1
          %s215 = smul.addr %s214, 24
          %s216 = scalar_lea.vmem [#allocation7], %s215
          %217 = dma.done %s213, 384
        $region48: #{tpu_custom_call.1} parent=43 // pred_fallthru
          _
      $region44: #{tpu_custom_call.1} parent=5 // pred_fallthru
        _
    $region6: #{tpu_custom_call.1} parent=1 // loop_footer
      %s19 = sadd.s32 1, %s15
    $region7: #{tpu_custom_call.1} parent=1 // loop_footer_branch
      %14 = sbr.rel target = $region3
    $region8: #{tpu_custom_call.1} parent=1 // loop_exit
      _
    %218 = vsyncpa [#allocation3], 1
    %s219 = scalar_lea.sflag [#allocation3], 1
    %220 = vsyncpa %s219, 1
    %221 = vsyncpa [#allocation6], 1
    %222 = vsyncpa [#allocation4], 1
    %s223 = scalar_lea.sflag [#allocation4], 1
    %224 = vsyncpa %s223, 1

</llo_original>
